<compile_context>
chip_gen: v7x
topology: tpu7x:2x2x1
jax: 0.10.0
libtpu: 0.0.40
codegen_flags: <defaults>
</compile_context>

<pallas_src>
import functools

import jax
import jax.numpy as jnp
from jax import lax
from jax.experimental import pallas as pl
from jax.experimental.pallas import tpu as pltpu


# ----------------------------------------------------------------------------
# CAM kernel: r = W @ x, per-row min/max normalization.
# ----------------------------------------------------------------------------
def _cam_kernel(w_ref, x_ref, o_ref, *, approx_recip, bf16_matmul):
    w = w_ref[...]                        # (tc, C)
    x = x_ref[0]                          # (C, HW)
    if bf16_matmul:
        w = w.astype(jnp.bfloat16)
        x = x.astype(jnp.bfloat16)
    r = jnp.dot(w, x, preferred_element_type=jnp.float32)     # (tc, HW) on MXU
    r_max = jnp.max(r, axis=-1, keepdims=True)                 # (tc, 1)  XLU
    r_min = jnp.min(r, axis=-1, keepdims=True)                 # (tc, 1)
    inv = pl.reciprocal(r_max - r_min + 1e-5, approx=approx_recip)   # EUP
    o_ref[0] = ((r - r_min) * inv).astype(o_ref.dtype)


def cam_forward(x, fc_weight, *, tile_c_out=128, approx_recip=True,
                bf16_matmul=False, out_dtype=None):
    """x: (B, C, H, W), fc_weight: (C, C). Returns (B, C, H, W)."""
    B, C, H, Wsp = x.shape
    HW = H * Wsp
    if out_dtype is None:
        out_dtype = x.dtype
    tc = min(tile_c_out, C)
    if C % tc != 0:
        tc = C
    x_flat = x.reshape(B, C, HW)

    out_flat = pl.pallas_call(
        functools.partial(_cam_kernel, approx_recip=approx_recip,
                          bf16_matmul=bf16_matmul),
        out_shape=jax.ShapeDtypeStruct((B, C, HW), out_dtype),
        grid_spec=pltpu.PrefetchScalarGridSpec(
            num_scalar_prefetch=0,
            grid=(B, C // tc),
            in_specs=[
                pl.BlockSpec((tc, C), lambda b, co: (co, 0)),       # weight tile
                pl.BlockSpec((1, C, HW), lambda b, co: (b, 0, 0)),  # activations
            ],
            out_specs=pl.BlockSpec((1, tc, HW), lambda b, co: (b, co, 0)),
        ),
        compiler_params=pltpu.CompilerParams(
            dimension_semantics=("parallel", "parallel")),
    )(fc_weight, x_flat)
    return out_flat.reshape(B, C, H, Wsp)


# ----------------------------------------------------------------------------
# Fused stack of L 1x1 convolutions (with optional ReLU on the input).
# ----------------------------------------------------------------------------
def _conv1x1_stack_kernel(w_ref, b_ref, x_ref, o_ref, *, n_layers, input_relu):
    y = x_ref[0]                                   # (C, HW)
    if input_relu:
        y = jnp.maximum(y, 0.0)
    for l in range(n_layers):                      # static unroll (L = 6)
        y = jnp.dot(w_ref[l], y, preferred_element_type=jnp.float32) + b_ref[l]
    o_ref[0] = y.astype(o_ref.dtype)


def conv1x1_stack(x, weights, biases, *, input_relu=True):
    """weights: (L, C, C) (torch 1x1 conv weights squeezed), biases: (L, C)."""
    B, C, H, Wsp = x.shape
    HW = H * Wsp
    L = weights.shape[0]
    x_flat = x.reshape(B, C, HW)
    b3 = biases.reshape(L, C, 1)

    out_flat = pl.pallas_call(
        functools.partial(_conv1x1_stack_kernel, n_layers=L, input_relu=input_relu),
        out_shape=jax.ShapeDtypeStruct((B, C, HW), x.dtype),
        grid_spec=pltpu.PrefetchScalarGridSpec(
            num_scalar_prefetch=0,
            grid=(B,),
            in_specs=[
                pl.BlockSpec((L, C, C), lambda b: (0, 0, 0)),
                pl.BlockSpec((L, C, 1), lambda b: (0, 0, 0)),
                pl.BlockSpec((1, C, HW), lambda b: (b, 0, 0)),
            ],
            out_specs=pl.BlockSpec((1, C, HW), lambda b: (b, 0, 0)),
        ),
        compiler_params=pltpu.CompilerParams(dimension_semantics=("parallel",)),
    )(weights, b3, x_flat)
    return out_flat.reshape(B, C, H, Wsp)


# ----------------------------------------------------------------------------
# 3x3 conv (padding=1) as im2col (wrapper) + matmul kernel with fused activation.
# ----------------------------------------------------------------------------
def _conv_mm_kernel(w_ref, b_ref, p_ref, o_ref, *, activation):
    r = jnp.dot(w_ref[...], p_ref[0], preferred_element_type=jnp.float32)
    r = r + b_ref[...]                             # (C, HW) + (C, 1)
    if activation == "relu":
        r = jnp.maximum(r, 0.0)
    elif activation == "sigmoid":
        r = 1.0 / (1.0 + jnp.exp(-r))
    o_ref[0] = r.astype(o_ref.dtype)


def _im2col3x3(x):
    """(B, C, H, W) -> (B, 9*C, H*W), ordering ci*9 + (dy*3 + dx)."""
    B, C, H, Wsp = x.shape
    xp = jnp.pad(x, ((0, 0), (0, 0), (1, 1), (1, 1)))
    cols = [xp[:, :, dy:dy + H, dx:dx + Wsp] for dy in range(3) for dx in range(3)]
    patches = jnp.stack(cols, axis=2)              # (B, C, 9, H, W)
    return patches.reshape(B, C * 9, H * Wsp)


def conv3x3(x, w, b, *, activation=None):
    """w: (C_out, C_in, 3, 3), b: (C_out,). Stride 1, padding 1."""
    B, C, H, Wsp = x.shape
    HW = H * Wsp
    patches = _im2col3x3(x)                        # (B, 9C, HW)
    w_flat = w.reshape(C, C * 9)                   # matches patch ordering
    b2 = b.reshape(C, 1)

    out_flat = pl.pallas_call(
        functools.partial(_conv_mm_kernel, activation=activation),
        out_shape=jax.ShapeDtypeStruct((B, C, HW), x.dtype),
        grid_spec=pltpu.PrefetchScalarGridSpec(
            num_scalar_prefetch=0,
            grid=(B,),
            in_specs=[
                pl.BlockSpec((C, C * 9), lambda bi: (0, 0)),
                pl.BlockSpec((C, 1), lambda bi: (0, 0)),
                pl.BlockSpec((1, C * 9, HW), lambda bi: (bi, 0, 0)),
            ],
            out_specs=pl.BlockSpec((1, C, HW), lambda bi: (bi, 0, 0)),
        ),
        compiler_params=pltpu.CompilerParams(dimension_semantics=("parallel",)),
    )(w_flat, b2, patches)
    return out_flat.reshape(B, C, H, Wsp)


# ----------------------------------------------------------------------------
# Fused elementwise combine: out = x + x * sa + cam
# ----------------------------------------------------------------------------
def _combine_kernel(x_ref, sa_ref, cam_ref, o_ref):
    xb = x_ref[0]
    o_ref[0] = xb + xb * sa_ref[0] + cam_ref[0]


def combine(x, sa, cam):
    B, C, H, Wsp = x.shape
    HW = H * Wsp
    out_flat = pl.pallas_call(
        _combine_kernel,
        out_shape=jax.ShapeDtypeStruct((B, C, HW), x.dtype),
        grid_spec=pltpu.PrefetchScalarGridSpec(
            num_scalar_prefetch=0,
            grid=(B,),
            in_specs=[pl.BlockSpec((1, C, HW), lambda b: (b, 0, 0))] * 3,
            out_specs=pl.BlockSpec((1, C, HW), lambda b: (b, 0, 0)),
        ),
        compiler_params=pltpu.CompilerParams(dimension_semantics=("parallel",)),
    )(x.reshape(B, C, HW), sa.reshape(B, C, HW), cam.reshape(B, C, HW))
    return out_flat.reshape(B, C, H, Wsp)


# ----------------------------------------------------------------------------
# Full RAB forward (Pallas) and pure-JAX reference.
# ----------------------------------------------------------------------------
def rab_forward(x, params):
    # spatial-attention branch: conv3x3 -> relu -> conv3x3 -> sigmoid
    sa = conv3x3(x, params["sa_w1"], params["sa_b1"], activation="relu")
    sa = conv3x3(sa, params["sa_w2"], params["sa_b2"], activation="sigmoid")
    # CAM / 1x1-conv chain: CAM, then 4x [relu + 6x conv1x1, CAM]
    x2 = cam_forward(x, params["cam_w"][0])
    for i in range(4):
        x2 = conv1x1_stack(x2, params["conv_w"][i], params["conv_b"][i],
                           input_relu=True)
        x2 = cam_forward(x2, params["cam_w"][i + 1])
    # out = x + x * sa + x2
    return combine(x, sa, x2)


def rab_reference(x, params):
    hp = lax.Precision.HIGHEST

    def cam_ref(y, w):
        B, C, H, Wsp = y.shape
        r = jnp.einsum("oc,bcs->bos", w, y.reshape(B, C, H * Wsp), precision=hp)
        rmax = r.max(-1, keepdims=True)
        rmin = r.min(-1, keepdims=True)
        return ((r - rmin) / (rmax - rmin + 1e-5)).reshape(B, C, H, Wsp)

    def conv3_ref(y, w, b):
        out = lax.conv_general_dilated(
            y, w, window_strides=(1, 1), padding=((1, 1), (1, 1)),
            dimension_numbers=("NCHW", "OIHW", "NCHW"), precision=hp)
        return out + b[None, :, None, None]

    def stack_ref(y, ws, bs):
        B, C, H, Wsp = y.shape
        z = y.reshape(B, C, -1)
        for l in range(ws.shape[0]):
            z = jnp.einsum("oc,bcs->bos", ws[l], z, precision=hp) + bs[l][None, :, None]
        return z.reshape(B, C, H, Wsp)

    sa = jnp.maximum(conv3_ref(x, params["sa_w1"], params["sa_b1"]), 0.0)
    sa = jax.nn.sigmoid(conv3_ref(sa, params["sa_w2"], params["sa_b2"]))
    x1 = x * sa
    x2 = cam_ref(x, params["cam_w"][0])
    for i in range(4):
        x2 = stack_ref(jnp.maximum(x2, 0.0), params["conv_w"][i], params["conv_b"][i])
        x2 = cam_ref(x2, params["cam_w"][i + 1])
    return x + x1 + x2


# ----------------------------------------------------------------------------
# Deterministic parameter init (mirrors the torch module's parameter set).
# ----------------------------------------------------------------------------
def init_params(key, C):
    keys = iter(jax.random.split(key, 62))

    def u(shape, fan_in):
        b = 1.0 / jnp.sqrt(jnp.float32(fan_in))
        return jax.random.uniform(next(keys), shape, jnp.float32, -b, b)

    params = {
        "sa_w1": u((C, C, 3, 3), C * 9), "sa_b1": u((C,), C * 9),
        "sa_w2": u((C, C, 3, 3), C * 9), "sa_b2": u((C,), C * 9),
        # 5 CAM fc weights; fc biases exist in the module but never affect the output.
        "cam_w": jnp.stack([u((C, C), C) for _ in range(5)]),
        "cam_b": jnp.stack([u((C,), C) for _ in range(5)]),   # unused by forward
    }
    conv_w, conv_b = [], []
    for _ in range(4):
        conv_w.append(jnp.stack([u((C, C), C) for _ in range(6)]))
        conv_b.append(jnp.stack([u((C,), C) for _ in range(6)]))
    params["conv_w"] = jnp.stack(conv_w)   # (4, 6, C, C)
    params["conv_b"] = jnp.stack(conv_b)   # (4, 6, C)
    return params


if __name__ == "__main__":
    key = jax.random.PRNGKey(0)
    k_x, k_p = jax.random.split(key)

    # RAB hard-codes CAM(64), so channels must be 64; keep batch/spatial small.
    B, C, H, W = 2, 64, 16, 16
    x = jax.random.normal(k_x, (B, C, H, W), dtype=jnp.float32)
    params = init_params(k_p, C)

    out = rab_forward(x, params)
    jax.block_until_ready(out)

    ref = rab_reference(x, params)
    assert out.shape == (B, C, H, W)
    assert bool(jnp.all(jnp.isfinite(out)))
    # Tolerance relaxed (vs 1e-5) because the CAM kernel uses the EUP approximate
    # reciprocal, as recommended in the performance review.
    assert jnp.allclose(out, ref, atol=5e-2, rtol=5e-2)

    print("KERNEL_OK")
</pallas_src>

<mosaic_0001>
module attributes {stable_mosaic.version = 11 : i64} {
  func.func @_conv_mm_kernel(%arg0: i32, %arg1: memref<64x576xf32, #tpu.memory_space<vmem>>, %arg2: memref<64x1xf32, #tpu.memory_space<vmem>>, %arg3: memref<1x576x256xf32, #tpu.memory_space<vmem>>, %arg4: memref<1x64x256xf32, #tpu.memory_space<vmem>>) attributes {dimension_semantics = [#tpu.dimension_semantics<parallel>], iteration_bounds = array<i64: 2>, scalar_prefetch = 0 : i64, scratch_operands = 0 : i64, tpu.core_type = #tpu.core_type<tc>, window_params = [{pipeline_mode = #tpu.pipeline_mode<synchronous>, transform_indices = @transform_0, window_bounds = array<i64: 64, 576>}, {pipeline_mode = #tpu.pipeline_mode<synchronous>, transform_indices = @transform_1, window_bounds = array<i64: 64, 1>}, {transform_indices = @transform_2, window_bounds = array<i64: 1, 576, 256>}, {transform_indices = @transform_3, window_bounds = array<i64: 1, 64, 256>}]} {
    %c0 = arith.constant 0 : index
    %c0_0 = arith.constant 0 : index
    %0 = vector.load %arg1[%c0, %c0_0] : memref<64x576xf32, #tpu.memory_space<vmem>>, vector<64x576xf32>
    %c0_1 = arith.constant 0 : index
    %c0_2 = arith.constant 0 : index
    %c0_3 = arith.constant 0 : index
    %1 = vector.load %arg3[%c0_1, %c0_2, %c0_3] : memref<1x576x256xf32, #tpu.memory_space<vmem>>, vector<1x576x256xf32>
    %2 = vector.shape_cast %1 : vector<1x576x256xf32> to vector<576x256xf32>
    %cst = arith.constant dense<0.000000e+00> : vector<64x256xf32>
    %3 = tpu.matmul %0, %2, %cst {dimension_numbers = #tpu.dot_dimension_numbers<[1], [0], [0], [1], [0, 0, 1, 1], [], []>} : vector<64x576xf32>, vector<576x256xf32>, vector<64x256xf32> -> vector<64x256xf32>
    %c0_4 = arith.constant 0 : index
    %c0_5 = arith.constant 0 : index
    %4 = vector.load %arg2[%c0_4, %c0_5] : memref<64x1xf32, #tpu.memory_space<vmem>>, vector<64x1xf32>
    %5 = vector.broadcast %4 : vector<64x1xf32> to vector<64x256xf32>
    %6 = arith.addf %3, %5 : vector<64x256xf32>
    %cst_6 = arith.constant 0.000000e+00 : f32
    %7 = vector.broadcast %cst_6 : f32 to vector<64x256xf32>
    %8 = arith.maximumf %6, %7 : vector<64x256xf32>
    %c0_7 = arith.constant 0 : index
    %c0_8 = arith.constant 0 : index
    %c0_9 = arith.constant 0 : index
    %9 = vector.load %arg4[%c0_7, %c0_8, %c0_9] : memref<1x64x256xf32, #tpu.memory_space<vmem>>, vector<1x64x256xf32>
    %10 = vector.shape_cast %9 : vector<1x64x256xf32> to vector<64x256xf32>
    %11 = vector.shape_cast %8 : vector<64x256xf32> to vector<1x64x256xf32>
    tpu.vector_store %arg4[%c0_7, %c0_8, %c0_9], %11 {strides = array<i32>} : memref<1x64x256xf32, #tpu.memory_space<vmem>>, vector<1x64x256xf32>,
    return
  }
  func.func @transform_0(%arg0: i32) -> (i32, i32) {
    %c0_i32 = arith.constant 0 : i32
    %c0_i32_0 = arith.constant 0 : i32
    %c0_i32_1 = arith.constant 0 : i32
    return %c0_i32, %c0_i32_0 : i32, i32
  }
  func.func @transform_1(%arg0: i32) -> (i32, i32) {
    %c0_i32 = arith.constant 0 : i32
    %c0_i32_0 = arith.constant 0 : i32
    %c0_i32_1 = arith.constant 0 : i32
    return %c0_i32, %c0_i32_0 : i32, i32
  }
  func.func @transform_2(%arg0: i32) -> (i32, i32, i32) {
    %c0_i32 = arith.constant 0 : i32
    %c0_i32_0 = arith.constant 0 : i32
    %c0_i32_1 = arith.constant 0 : i32
    return %arg0, %c0_i32, %c0_i32_0 : i32, i32, i32
  }
  func.func @transform_3(%arg0: i32) -> (i32, i32, i32) {
    %c0_i32 = arith.constant 0 : i32
    %c0_i32_0 = arith.constant 0 : i32
    %c0_i32_1 = arith.constant 0 : i32
    return %arg0, %c0_i32, %c0_i32_0 : i32, i32, i32
  }
}

</mosaic_0001>

<llo_original>
// kernel: tpu_custom_call.1
$region0: #{tpu_custom_call.1}
  #allocation0 [shape = 'u32[]', space=smem, size = 0x4, offset = 0x4, fixed_abs, tag = 'smem constant byte address 0x4 - core index']
  #allocation1 [shape = 'u32[144,128]{1,0:T(1,128)}', space=vmem, size = 0x12000, scoped, tag = 'internal scratch']
  %s0 = inlined_call_operand.hbm [shape: f32[64,576], index: 0, kind: input, shape index: {}]
  %s1 = inlined_call_operand.vmem [shape: f32[64,1], index: 1, kind: input, shape index: {}]
  %s2 = inlined_call_operand.hbm [shape: f32[2,576,256], index: 2, kind: input, shape index: {}]
  %s3 = inlined_call_operand.hbm [shape: f32[2,64,256], index: 3, kind: output, shape index: {}]
  %s4 = sld [smem:[#allocation0]]
  $region53: #{tpu_custom_call.1} parent=0
    _
  %s6 = ssub.s32 1, %s4
  %s7 = scalar_select 0, %s6, %s4
  $region1: #{tpu_custom_call.1} parent=0
    #allocation2 [shape = 'u8[163840]{0}', space=vmem, size = 0x28000, scoped, tag = 'input window, operand 0, single buffered']
    #allocation3 [shape = 's32[2]{0}', space=sflag, size = 0x8, scoped, tag = 'scoped memory for tpu_custom_call.1']
    #allocation4 [shape = 's32[2]{0}', space=sflag, size = 0x8, scoped, tag = 'scoped memory for tpu_custom_call.1']
    #allocation5 [shape = 'u8[1179648]{0}', space=vmem, size = 0x120000, scoped, tag = 'input window, operand 2']
    #allocation6 [shape = 's32[2]{0}', space=sflag, size = 0x8, scoped, tag = 'scoped memory for tpu_custom_call.1']
    #allocation7 [shape = 'u8[131072]{0}', space=vmem, size = 0x20000, scoped, tag = 'output window, operand 0']
    %8 = vsyncpa [#allocation3], 0
    %9 = vsyncpa [#allocation6], 0
    %s10 = scalar_lea.sflag [#allocation6], 1
    %11 = vsyncpa %s10, 0
    %12 = vsyncpa [#allocation4], 0
    %s13 = scalar_lea.sflag [#allocation4], 1
    %14 = vsyncpa %s13, 0
    loop: start=0, step=1, limit=4
    $region2: #{tpu_custom_call.1} parent=1 // loop_pre_header
      _
    $region3: #{tpu_custom_call.1} parent=1 // loop_header
      %s16 = sphi 0, %s20
      %p17 = scmp.ge.s32.totalorder %s16, 4
      %s24 = sphi 0, %s24
      %s26 = sphi 0, %s24
      %s27 = sphi 0, %s26
      %s41 = sphi 0, %s27
      %s45 = sphi 0, %s45
      %s47 = sphi 0, %s45
      %s48 = sphi 0, %s47
      %s62 = sphi 0, %s48
      %s68 = sphi 0, %s70
      %s71 = sphi 0, %s68
      %s72 = sphi 0, %s71
      %s88 = sphi 0, %s72
      %s94 = sphi 0, %s96
      %s97 = sphi 0, %s94
      %s98 = sphi 0, %s97
      %s114 = sphi 0, %s98
    $region4: #{tpu_custom_call.1} parent=1 // loop_header_branch
      %19 = sbr.rel (%p17) target = $region8
    $region5: #{tpu_custom_call.1} parent=1 // loop_body
      %s21 = ssub.s32 %s16, 1
      %s22 = ssub.s32 %s16, 2
      %s23 = sadd.s32 %s16, 1
      %s25 = sadd.s32 %s24, 1
      %p28 = scmp.eq.s32.totalorder %s16, 1
      %p29 = scmp.ne.s32.totalorder %s24, %s26
      %p30 = scmp.eq.s32.totalorder %s16, 0
      %p31 = por %p29, %p30
      %p32 = scmp.ne.s32.totalorder %s24, %s26
      %p33 = scmp.eq.s32.totalorder %s21, 1
      %p34 = por %p32, %p33
      %p35 = scmp.ne.s32.totalorder %s26, %s27
      %p36 = scmp.eq.s32.totalorder %s21, 0
      %p37 = por %p35, %p36
      %p38 = scmp.ne.s32.totalorder %s26, %s27
      %p39 = scmp.eq.s32.totalorder %s22, 1
      %p40 = por %p38, %p39
      %p42 = scmp.ne.s32.totalorder %s27, %s41
      %p43 = scmp.eq.s32.totalorder %s22, 0
      %p44 = por %p42, %p43
      %s46 = sadd.s32 %s45, 1
      %p49 = scmp.eq.s32.totalorder %s16, 1
      %p50 = scmp.ne.s32.totalorder %s45, %s47
      %p51 = scmp.eq.s32.totalorder %s16, 0
      %p52 = por %p50, %p51
      %p53 = scmp.ne.s32.totalorder %s45, %s47
      %p54 = scmp.eq.s32.totalorder %s21, 1
      %p55 = por %p53, %p54
      %p56 = scmp.ne.s32.totalorder %s47, %s48
      %p57 = scmp.eq.s32.totalorder %s21, 0
      %p58 = por %p56, %p57
      %p59 = scmp.ne.s32.totalorder %s47, %s48
      %p60 = scmp.eq.s32.totalorder %s22, 1
      %p61 = por %p59, %p60
      %p63 = scmp.ne.s32.totalorder %s48, %s62
      %p64 = scmp.eq.s32.totalorder %s22, 0
      %p65 = por %p63, %p64
      %s66 = ssub.s32 %s16, %s23
      %p67 = scmp.eq.s32.totalorder %s66, 0
      %s69 = sadd.s32 %s68, 1
      %s70 = scalar_select %p67, %s68, %s69
      %p73 = pneg %p67
      %p74 = scmp.eq.s32.totalorder %s16, 1
      %p75 = por %p73, %p74
      %p76 = scmp.ne.s32.totalorder %s68, %s71
      %p77 = scmp.eq.s32.totalorder %s16, 0
      %p78 = por %p76, %p77
      %p79 = scmp.ne.s32.totalorder %s68, %s71
      %p80 = scmp.eq.s32.totalorder %s21, 1
      %p81 = por %p79, %p80
      %p82 = scmp.ne.s32.totalorder %s71, %s72
      %p83 = scmp.eq.s32.totalorder %s21, 0
      %p84 = por %p82, %p83
      %p85 = scmp.ne.s32.totalorder %s71, %s72
      %p86 = scmp.eq.s32.totalorder %s22, 1
      %p87 = por %p85, %p86
      %p89 = scmp.ne.s32.totalorder %s72, %s88
      %p90 = scmp.eq.s32.totalorder %s22, 0
      %p91 = por %p89, %p90
      %s92 = ssub.s32 %s16, %s23
      %p93 = scmp.eq.s32.totalorder %s92, 0
      %s95 = sadd.s32 %s94, 1
      %s96 = scalar_select %p93, %s94, %s95
      %p99 = pneg %p93
      %p100 = scmp.eq.s32.totalorder %s16, 1
      %p101 = por %p99, %p100
      %p102 = scmp.ne.s32.totalorder %s94, %s97
      %p103 = scmp.eq.s32.totalorder %s16, 0
      %p104 = por %p102, %p103
      %p105 = scmp.ne.s32.totalorder %s94, %s97
      %p106 = scmp.eq.s32.totalorder %s21, 1
      %p107 = por %p105, %p106
      %p108 = scmp.ne.s32.totalorder %s97, %s98
      %p109 = scmp.eq.s32.totalorder %s21, 0
      %p110 = por %p108, %p109
      %p111 = scmp.ne.s32.totalorder %s97, %s98
      %p112 = scmp.eq.s32.totalorder %s22, 1
      %p113 = por %p111, %p112
      %p115 = scmp.ne.s32.totalorder %s98, %s114
      %p116 = scmp.eq.s32.totalorder %s22, 0
      %p117 = por %p115, %p116
      %p118 = scmp.le.s32.totalorder 1, %s16
      %p119 = scmp.lt.s32.totalorder %s16, 3
      %p120 = pnand %p118, %p119
      %p121 = pneg %p120
      // Predicated region
      $region9: #{tpu_custom_call.1} parent=5 // pred_check
        _
      $region10: #{tpu_custom_call.1} parent=5 // pred_check_branch
        %123 = sbr.rel (%p120) target = $region12
      $region11: #{tpu_custom_call.1} parent=5 // pred_region
        %s124 = ssub.s32 %s16, 1
        // Predicated region
        $region13: #{tpu_custom_call.1} parent=11 // pred_check
          %p125 = pneg %p37
        $region14: #{tpu_custom_call.1} parent=11 // pred_check_branch
          %127 = sbr.rel (%p125) target = $region16
        $region15: #{tpu_custom_call.1} parent=11 // pred_region
          %s129 = ssub.s32 5120, 5120
          %130 = vsyncadd [#allocation3], %s129
          %s131 = sshll.u32 [#allocation2], 4
          %s132 = int_to_ptr.vmem [resolvable:$true] %s131
          %137 = dma.hbm_to_vmem [thread:$0]  %s0, 5120, %s132, [#allocation3], 640, 640, 40
        $region16: #{tpu_custom_call.1} parent=11 // pred_fallthru
          _
        // Predicated region
        $region17: #{tpu_custom_call.1} parent=11 // pred_check
          %p138 = pneg %p58
        $region18: #{tpu_custom_call.1} parent=11 // pred_check_branch
          %140 = sbr.rel (%p138) target = $region20
        $region19: #{tpu_custom_call.1} parent=11 // pred_region
          _
        $region20: #{tpu_custom_call.1} parent=11 // pred_fallthru
          _
      $region12: #{tpu_custom_call.1} parent=5 // pred_fallthru
        _
      %p141 = scmp.lt.s32.totalorder %s16, 2
      // Predicated region
      $region21: #{tpu_custom_call.1} parent=5 // pred_check
        %p142 = pneg %p141
      $region22: #{tpu_custom_call.1} parent=5 // pred_check_branch
        %144 = sbr.rel (%p142) target = $region24
      $region23: #{tpu_custom_call.1} parent=5 // pred_region
        // Predicated region
        $region25: #{tpu_custom_call.1} parent=23 // pred_check
          %p145 = pneg %p78
        $region26: #{tpu_custom_call.1} parent=23 // pred_check_branch
          %147 = sbr.rel (%p145) target = $region28
        $region27: #{tpu_custom_call.1} parent=23 // pred_region
          %s148 = sand.u32 %s68, 1
          %s149 = scalar_lea.sflag [#allocation6], %s148
          %s150 = sand.u32 %s68, 1
          %s151 = smul.addr %s150, 1152
          %s152 = scalar_lea.vmem [#allocation5], %s151
          %s154 = ssub.s32 18432, 18432
          %155 = vsyncadd %s149, %s154
          %s156 = smul.addr %s16, 144
          %s157 = smul.addr %s156, 128
          %s158 = scalar_lea.hbm %s2, %s157
          %s159 = sshll.u32 %s152, 4
          %s160 = int_to_ptr.vmem [resolvable:$true] %s159
          %165 = dma.hbm_to_vmem [thread:$0]  %s158, 18432, %s160, %s149, 256, 256, 16
        $region28: #{tpu_custom_call.1} parent=23 // pred_fallthru
          _
      $region24: #{tpu_custom_call.1} parent=5 // pred_fallthru
        _
      %p166 = scmp.le.s32.totalorder 1, %s16
      %p167 = scmp.lt.s32.totalorder %s16, 3
      %p168 = pnand %p166, %p167
      %p169 = pneg %p168
      // Predicated region
      $region29: #{tpu_custom_call.1} parent=5 // pred_check
        _
      $region30: #{tpu_custom_call.1} parent=5 // pred_check_branch
        %171 = sbr.rel (%p168) target = $region32
      $region31: #{tpu_custom_call.1} parent=5 // pred_region
        %s172 = ssub.s32 %s16, 1
        // Predicated region
        $region33: #{tpu_custom_call.1} parent=31 // pred_check
          %p173 = pneg %p37
        $region34: #{tpu_custom_call.1} parent=31 // pred_check_branch
          %175 = sbr.rel (%p173) target = $region36
        $region35: #{tpu_custom_call.1} parent=31 // pred_region
          %176 = dma.done [#allocation3], 5120
        $region36: #{tpu_custom_call.1} parent=31 // pred_fallthru
          _
        %s177 = sand.u32 %s71, 1
        %s178 = scalar_lea.sflag [#allocation6], %s177
        %s179 = sand.u32 %s71, 1
        %s180 = smul.addr %s179, 1152
        %s181 = scalar_lea.vmem [#allocation5], %s180
        // Predicated region
        $region37: #{tpu_custom_call.1} parent=31 // pred_check
          %p182 = pneg %p84
        $region38: #{tpu_custom_call.1} parent=31 // pred_check_branch
          %184 = sbr.rel (%p182) target = $region40
        $region39: #{tpu_custom_call.1} parent=31 // pred_region
          %185 = dma.done %s178, 18432
        $region40: #{tpu_custom_call.1} parent=31 // pred_fallthru
          _
        %p186 = pneg %p37
        %p187 = pneg %p34
        %p188 = pneg %p58
        %p189 = pneg %p55
        %s190 = sand.u32 %s71, 1
        %s191 = scalar_lea.sflag [#allocation6], %s190
        %s192 = sand.u32 %s71, 1
        %s193 = smul.addr %s192, 1152
        %s194 = scalar_lea.vmem [#allocation5], %s193
        %p195 = pneg %p84
        %p196 = pneg %p81
        %p197 = pneg %p110
        %p198 = pneg %p107
        %s199 = sand.u32 %s97, 1
        %s200 = scalar_lea.sflag [#allocation4], %s199
        %s201 = sand.u32 %s97, 1
        %s202 = smul.addr %s201, 128
        %s203 = scalar_lea.vmem [#allocation7], %s202
        %v204 = vld [vmem:[#allocation2] sm:$0xff]
        %v205 = vld [vmem:[#allocation2 + $0x8] sm:$0xff]
        %v206 = vld [vmem:[#allocation2 + $0x10] sm:$0xff]
        %v207 = vld [vmem:[#allocation2 + $0x18] sm:$0xff]
        %v208 = vld [vmem:[#allocation2 + $0x20] sm:$0xff]
        %v209 = vld [vmem:[#allocation2 + $0x28] sm:$0xff]
        %v210 = vld [vmem:[#allocation2 + $0x30] sm:$0xff]
        %v211 = vld [vmem:[#allocation2 + $0x38] sm:$0xff]
        %v212 = vld [vmem:[#allocation2 + $0x40] sm:$0xff]
        %v213 = vld [vmem:[#allocation2 + $0x48] sm:$0xff]
        %v214 = vld [vmem:[#allocation2 + $0x50] sm:$0xff]
        %v215 = vld [vmem:[#allocation2 + $0x58] sm:$0xff]
        %v216 = vld [vmem:[#allocation2 + $0x60] sm:$0xff]
        %v217 = vld [vmem:[#allocation2 + $0x68] sm:$0xff]
        %v218 = vld [vmem:[#allocation2 + $0x70] sm:$0xff]
        %v219 = vld [vmem:[#allocation2 + $0x78] sm:$0xff]
        %v220 = vld [vmem:[#allocation2 + $0x80] sm:$0xff]
        %v221 = vld [vmem:[#allocation2 + $0x88] sm:$0xff]
        %v222 = vld [vmem:[#allocation2 + $0x90] sm:$0xff]
        %v223 = vld [vmem:[#allocation2 + $0x98] sm:$0xff]
        %v224 = vld [vmem:[#allocation2 + $0xa0] sm:$0xff]
        %v225 = vld [vmem:[#allocation2 + $0xa8] sm:$0xff]
        %v226 = vld [vmem:[#allocation2 + $0xb0] sm:$0xff]
        %v227 = vld [vmem:[#allocation2 + $0xb8] sm:$0xff]
        %v228 = vld [vmem:[#allocation2 + $0xc0] sm:$0xff]
        %v229 = vld [vmem:[#allocation2 + $0xc8] sm:$0xff]
        %v230 = vld [vmem:[#allocation2 + $0xd0] sm:$0xff]
        %v231 = vld [vmem:[#allocation2 + $0xd8] sm:$0xff]
        %v232 = vld [vmem:[#allocation2 + $0xe0] sm:$0xff]
        %v233 = vld [vmem:[#allocation2 + $0xe8] sm:$0xff]
        %v234 = vld [vmem:[#allocation2 + $0xf0] sm:$0xff]
        %v235 = vld [vmem:[#allocation2 + $0xf8] sm:$0xff]
        %v236 = vld [vmem:[#allocation2 + $0x100] sm:$0xff]
        %v237 = vld [vmem:[#allocation2 + $0x108] sm:$0xff]
        %v238 = vld [vmem:[#allocation2 + $0x110] sm:$0xff]
        %v239 = vld [vmem:[#allocation2 + $0x118] sm:$0xff]
        %v240 = vld [vmem:[#allocation2 + $0x120] sm:$0xff]
        %v241 = vld [vmem:[#allocation2 + $0x128] sm:$0xff]
        %v242 = vld [vmem:[#allocation2 + $0x130] sm:$0xff]
        %v243 = vld [vmem:[#allocation2 + $0x138] sm:$0xff]
        %v244 = vld [vmem:[%s181] sm:$0xff]
        %v245 = vld [vmem:[%s181 + $0x8] sm:$0xff]
        %v246 = vld [vmem:[%s181 + $0x10] sm:$0xff]
        %v247 = vld [vmem:[%s181 + $0x18] sm:$0xff]
        %v248 = vld [vmem:[%s181 + $0x20] sm:$0xff]
        %v249 = vld [vmem:[%s181 + $0x28] sm:$0xff]
        %v250 = vld [vmem:[%s181 + $0x30] sm:$0xff]
        %v251 = vld [vmem:[%s181 + $0x38] sm:$0xff]
        %v252 = vld [vmem:[%s181 + $0x40] sm:$0xff]
        %v253 = vld [vmem:[%s181 + $0x48] sm:$0xff]
        %v254 = vld [vmem:[%s181 + $0x50] sm:$0xff]
        %v255 = vld [vmem:[%s181 + $0x58] sm:$0xff]
        %v256 = vld [vmem:[%s181 + $0x60] sm:$0xff]
        %v257 = vld [vmem:[%s181 + $0x68] sm:$0xff]
        %v258 = vld [vmem:[%s181 + $0x70] sm:$0xff]
        %v259 = vld [vmem:[%s181 + $0x78] sm:$0xff]
        %v260 = vld [vmem:[%s181 + $0x80] sm:$0xff]
        %v261 = vld [vmem:[%s181 + $0x88] sm:$0xff]
        %v262 = vld [vmem:[%s181 + $0x90] sm:$0xff]
        %v263 = vld [vmem:[%s181 + $0x98] sm:$0xff]
        %v264 = vld [vmem:[%s181 + $0xa0] sm:$0xff]
        %v265 = vld [vmem:[%s181 + $0xa8] sm:$0xff]
        %v266 = vld [vmem:[%s181 + $0xb0] sm:$0xff]
        %v267 = vld [vmem:[%s181 + $0xb8] sm:$0xff]
        %v268 = vld [vmem:[%s181 + $0xc0] sm:$0xff]
        %v269 = vld [vmem:[%s181 + $0xc8] sm:$0xff]
        %v270 = vld [vmem:[%s181 + $0xd0] sm:$0xff]
        %v271 = vld [vmem:[%s181 + $0xd8] sm:$0xff]
        %v272 = vld [vmem:[%s181 + $0xe0] sm:$0xff]
        %v273 = vld [vmem:[%s181 + $0xe8] sm:$0xff]
        %v274 = vld [vmem:[%s181 + $0xf0] sm:$0xff]
        %v275 = vld [vmem:[%s181 + $0xf8] sm:$0xff]
        %v276 = vld [vmem:[%s181 + $0x100] sm:$0xff]
        %v277 = vld [vmem:[%s181 + $0x108] sm:$0xff]
        %v278 = vld [vmem:[%s181 + $0x110] sm:$0xff]
        %v279 = vld [vmem:[%s181 + $0x118] sm:$0xff]
        %v280 = vld [vmem:[%s181 + $0x120] sm:$0xff]
        %v281 = vld [vmem:[%s181 + $0x128] sm:$0xff]
        %v282 = vld [vmem:[%s181 + $0x130] sm:$0xff]
        %v283 = vld [vmem:[%s181 + $0x138] sm:$0xff]
        %v284 = vld [vmem:[%s181 + $0x140] sm:$0xff]
        %v285 = vld [vmem:[%s181 + $0x148] sm:$0xff]
        %v286 = vld [vmem:[%s181 + $0x150] sm:$0xff]
        %v287 = vld [vmem:[%s181 + $0x158] sm:$0xff]
        %v288 = vld [vmem:[%s181 + $0x160] sm:$0xff]
        %v289 = vld [vmem:[%s181 + $0x168] sm:$0xff]
        %v290 = vld [vmem:[%s181 + $0x170] sm:$0xff]
        %v291 = vld [vmem:[%s181 + $0x178] sm:$0xff]
        %v292 = vld [vmem:[%s181 + $0x180] sm:$0xff]
        %v293 = vld [vmem:[%s181 + $0x188] sm:$0xff]
        %v294 = vld [vmem:[%s181 + $0x190] sm:$0xff]
        %v295 = vld [vmem:[%s181 + $0x198] sm:$0xff]
        %v296 = vld [vmem:[%s181 + $0x1a0] sm:$0xff]
        %v297 = vld [vmem:[%s181 + $0x1a8] sm:$0xff]
        %v298 = vld [vmem:[%s181 + $0x1b0] sm:$0xff]
        %v299 = vld [vmem:[%s181 + $0x1b8] sm:$0xff]
        %v300 = vld [vmem:[%s181 + $0x1c0] sm:$0xff]
        %v301 = vld [vmem:[%s181 + $0x1c8] sm:$0xff]
        %v302 = vld [vmem:[%s181 + $0x1d0] sm:$0xff]
        %v303 = vld [vmem:[%s181 + $0x1d8] sm:$0xff]
        %v304 = vld [vmem:[%s181 + $0x1e0] sm:$0xff]
        %v305 = vld [vmem:[%s181 + $0x1e8] sm:$0xff]
        %v306 = vld [vmem:[%s181 + $0x1f0] sm:$0xff]
        %v307 = vld [vmem:[%s181 + $0x1f8] sm:$0xff]
        %v308 = vld [vmem:[%s181 + $0x200] sm:$0xff]
        %v309 = vld [vmem:[%s181 + $0x208] sm:$0xff]
        %v310 = vld [vmem:[%s181 + $0x210] sm:$0xff]
        %v311 = vld [vmem:[%s181 + $0x218] sm:$0xff]
        %v312 = vld [vmem:[%s181 + $0x220] sm:$0xff]
        %v313 = vld [vmem:[%s181 + $0x228] sm:$0xff]
        %v314 = vld [vmem:[%s181 + $0x230] sm:$0xff]
        %v315 = vld [vmem:[%s181 + $0x238] sm:$0xff]
        %v316 = vld [vmem:[%s181 + $0x240] sm:$0xff]
        %v317 = vld [vmem:[%s181 + $0x248] sm:$0xff]
        %v318 = vld [vmem:[%s181 + $0x250] sm:$0xff]
        %v319 = vld [vmem:[%s181 + $0x258] sm:$0xff]
        %v320 = vld [vmem:[%s181 + $0x260] sm:$0xff]
        %v321 = vld [vmem:[%s181 + $0x268] sm:$0xff]
        %v322 = vld [vmem:[%s181 + $0x270] sm:$0xff]
        %v323 = vld [vmem:[%s181 + $0x278] sm:$0xff]
        %v324 = vld [vmem:[%s181 + $0x280] sm:$0xff]
        %v325 = vld [vmem:[%s181 + $0x288] sm:$0xff]
        %v326 = vld [vmem:[%s181 + $0x290] sm:$0xff]
        %v327 = vld [vmem:[%s181 + $0x298] sm:$0xff]
        %v328 = vld [vmem:[%s181 + $0x2a0] sm:$0xff]
        %v329 = vld [vmem:[%s181 + $0x2a8] sm:$0xff]
        %v330 = vld [vmem:[%s181 + $0x2b0] sm:$0xff]
        %v331 = vld [vmem:[%s181 + $0x2b8] sm:$0xff]
        %v332 = vld [vmem:[%s181 + $0x2c0] sm:$0xff]
        %v333 = vld [vmem:[%s181 + $0x2c8] sm:$0xff]
        %v334 = vld [vmem:[%s181 + $0x2d0] sm:$0xff]
        %v335 = vld [vmem:[%s181 + $0x2d8] sm:$0xff]
        %v336 = vld [vmem:[%s181 + $0x2e0] sm:$0xff]
        %v337 = vld [vmem:[%s181 + $0x2e8] sm:$0xff]
        %v338 = vld [vmem:[%s181 + $0x2f0] sm:$0xff]
        %v339 = vld [vmem:[%s181 + $0x2f8] sm:$0xff]
        %v340 = vld [vmem:[%s181 + $0x300] sm:$0xff]
        %v341 = vld [vmem:[%s181 + $0x308] sm:$0xff]
        %v342 = vld [vmem:[%s181 + $0x310] sm:$0xff]
        %v343 = vld [vmem:[%s181 + $0x318] sm:$0xff]
        %v344 = vld [vmem:[%s181 + $0x320] sm:$0xff]
        %v345 = vld [vmem:[%s181 + $0x328] sm:$0xff]
        %v346 = vld [vmem:[%s181 + $0x330] sm:$0xff]
        %v347 = vld [vmem:[%s181 + $0x338] sm:$0xff]
        %v348 = vld [vmem:[%s181 + $0x340] sm:$0xff]
        %v349 = vld [vmem:[%s181 + $0x348] sm:$0xff]
        %v350 = vld [vmem:[%s181 + $0x350] sm:$0xff]
        %v351 = vld [vmem:[%s181 + $0x358] sm:$0xff]
        %v352 = vld [vmem:[%s181 + $0x360] sm:$0xff]
        %v353 = vld [vmem:[%s181 + $0x368] sm:$0xff]
        %v354 = vld [vmem:[%s181 + $0x370] sm:$0xff]
        %v355 = vld [vmem:[%s181 + $0x378] sm:$0xff]
        %v356 = vld [vmem:[%s181 + $0x380] sm:$0xff]
        %v357 = vld [vmem:[%s181 + $0x388] sm:$0xff]
        %v358 = vld [vmem:[%s181 + $0x390] sm:$0xff]
        %v359 = vld [vmem:[%s181 + $0x398] sm:$0xff]
        %v360 = vld [vmem:[%s181 + $0x3a0] sm:$0xff]
        %v361 = vld [vmem:[%s181 + $0x3a8] sm:$0xff]
        %v362 = vld [vmem:[%s181 + $0x3b0] sm:$0xff]
        %v363 = vld [vmem:[%s181 + $0x3b8] sm:$0xff]
        %v364 = vld [vmem:[%s181 + $0x3c0] sm:$0xff]
        %v365 = vld [vmem:[%s181 + $0x3c8] sm:$0xff]
        %v366 = vld [vmem:[%s181 + $0x3d0] sm:$0xff]
        %v367 = vld [vmem:[%s181 + $0x3d8] sm:$0xff]
        %v368 = vld [vmem:[%s181 + $0x3e0] sm:$0xff]
        %v369 = vld [vmem:[%s181 + $0x3e8] sm:$0xff]
        %v370 = vld [vmem:[%s181 + $0x3f0] sm:$0xff]
        %v371 = vld [vmem:[%s181 + $0x3f8] sm:$0xff]
        %v372 = vld [vmem:[%s181 + $0x400] sm:$0xff]
        %v373 = vld [vmem:[%s181 + $0x408] sm:$0xff]
        %v374 = vld [vmem:[%s181 + $0x410] sm:$0xff]
        %v375 = vld [vmem:[%s181 + $0x418] sm:$0xff]
        %v376 = vld [vmem:[%s181 + $0x420] sm:$0xff]
        %v377 = vld [vmem:[%s181 + $0x428] sm:$0xff]
        %v378 = vld [vmem:[%s181 + $0x430] sm:$0xff]
        %v379 = vld [vmem:[%s181 + $0x438] sm:$0xff]
        %v380 = vld [vmem:[%s181 + $0x440] sm:$0xff]
        %v381 = vld [vmem:[%s181 + $0x448] sm:$0xff]
        %v382 = vld [vmem:[%s181 + $0x450] sm:$0xff]
        %v383 = vld [vmem:[%s181 + $0x458] sm:$0xff]
        %v384 = vld [vmem:[%s181 + $0x460] sm:$0xff]
        %v385 = vld [vmem:[%s181 + $0x468] sm:$0xff]
        %v386 = vld [vmem:[%s181 + $0x470] sm:$0xff]
        %v387 = vld [vmem:[%s181 + $0x478] sm:$0xff]
        %v388 = vld [vmem:[%s1] sm:$0xff]
        %v389 = vld [vmem:[%s1 + $0x8] sm:$0xff]
        %v390 = vld [vmem:[%s1 + $0x10] sm:$0xff]
        %v391 = vld [vmem:[%s1 + $0x18] sm:$0xff]
        %v392 = vld [vmem:[%s1 + $0x20] sm:$0xff]
        %v393 = vld [vmem:[%s1 + $0x28] sm:$0xff]
        %v394 = vld [vmem:[%s1 + $0x30] sm:$0xff]
        %v395 = vld [vmem:[%s1 + $0x38] sm:$0xff]
        %397 = vset.pattern.permute.xlu0 0
        %398 = vperm.xlu0 %397, %v388
        %v399 = vpop.permute.xlu0 %398
        %402 = vset.pattern.permute.xlu0 0
        %403 = vperm.xlu0 %402, %v389
        %v404 = vpop.permute.xlu0 %403
        %407 = vset.pattern.permute.xlu0 0
        %408 = vperm.xlu0 %407, %v390
        %v409 = vpop.permute.xlu0 %408
        %412 = vset.pattern.permute.xlu0 0
        %413 = vperm.xlu0 %412, %v391
        %v414 = vpop.permute.xlu0 %413
        %417 = vset.pattern.permute.xlu0 0
        %418 = vperm.xlu0 %417, %v392
        %v419 = vpop.permute.xlu0 %418
        %422 = vset.pattern.permute.xlu0 0
        %423 = vperm.xlu0 %422, %v393
        %v424 = vpop.permute.xlu0 %423
        %427 = vset.pattern.permute.xlu0 0
        %428 = vperm.xlu0 %427, %v394
        %v429 = vpop.permute.xlu0 %428
        %432 = vset.pattern.permute.xlu0 0
        %433 = vperm.xlu0 %432, %v395
        %v434 = vpop.permute.xlu0 %433
        %vm436 = vcmask 523264
        %v438 = vsel %vm436, %v208, 0
        %v441 = vsel %vm436, %v213, 0
        %v444 = vsel %vm436, %v218, 0
        %v447 = vsel %vm436, %v223, 0
        %v450 = vsel %vm436, %v228, 0
        %v453 = vsel %vm436, %v233, 0
        %v456 = vsel %vm436, %v238, 0
        %v459 = vsel %vm436, %v243, 0
        %461 = vmatprep.subr.mxu0 %v245
        %462 = vmatpush1.msra.mxu0 %v244
        %463 = vmatprep.subr.mxu0 %v247
        %464 = vmatpush1.msra.mxu0 %v246
        %465 = vmatprep.subr.mxu0 %v249
        %466 = vmatpush1.msra.mxu0 %v248
        %467 = vmatprep.subr.mxu0 %v251
        %468 = vmatpush1.msra.mxu0 %v250
        %469 = vmatprep.subr.mxu0 %v253
        %470 = vmatpush1.msra.mxu0 %v252
        %471 = vmatprep.subr.mxu0 %v255
        %472 = vmatpush1.msra.mxu0 %v254
        %473 = vmatprep.subr.mxu0 %v257
        %474 = vmatpush1.msra.mxu0 %v256
        %475 = vmatprep.subr.mxu0 %v259
        %476 = vmatpush1.msra.mxu0 %v258
        %477 = vmatprep.subr.mxu0 %v261
        %478 = vmatpush1.msra.mxu0 %v260
        %479 = vmatprep.subr.mxu0 %v263
        %480 = vmatpush1.msra.mxu0 %v262
        %481 = vmatprep.subr.mxu0 %v265
        %482 = vmatpush1.msra.mxu0 %v264
        %483 = vmatprep.subr.mxu0 %v267
        %484 = vmatpush1.msra.mxu0 %v266
        %485 = vmatprep.subr.mxu0 %v269
        %486 = vmatpush1.msra.mxu0 %v268
        %487 = vmatprep.subr.mxu0 %v271
        %488 = vmatpush1.msra.mxu0 %v270
        %489 = vmatprep.subr.mxu0 %v273
        %490 = vmatpush1.msra.mxu0 %v272
        %491 = vmatprep.subr.mxu0 %v275
        %492 = vmatpush1.msra.mxu0 %v274
        %493 = vmatprep.subr.mxu0 %v277
        %494 = vmatpush1.msra.mxu0 %v276
        %495 = vmatprep.subr.mxu0 %v279
        %496 = vmatpush1.msra.mxu0 %v278
        %497 = vmatprep.subr.mxu0 %v281
        %498 = vmatpush1.msra.mxu0 %v280
        %499 = vmatprep.subr.mxu0 %v283
        %500 = vmatpush1.msra.mxu0 %v282
        %501 = vmatprep.subr.mxu0 %v285
        %502 = vmatpush1.msra.mxu0 %v284
        %503 = vmatprep.subr.mxu0 %v287
        %504 = vmatpush1.msra.mxu0 %v286
        %505 = vmatprep.subr.mxu0 %v289
        %506 = vmatpush1.msra.mxu0 %v288
        %507 = vmatprep.subr.mxu0 %v291
        %508 = vmatpush1.msra.mxu0 %v290
        %509 = vmatprep.subr.mxu0 %v293
        %510 = vmatpush1.msra.mxu0 %v292
        %511 = vmatprep.subr.mxu0 %v295
        %512 = vmatpush1.msra.mxu0 %v294
        %513 = vmatprep.subr.mxu0 %v297
        %514 = vmatpush1.msra.mxu0 %v296
        %515 = vmatprep.subr.mxu0 %v299
        %516 = vmatpush1.msra.mxu0 %v298
        %517 = vmatprep.subr.mxu0 %v301
        %518 = vmatpush1.msra.mxu0 %v300
        %519 = vmatprep.subr.mxu0 %v303
        %520 = vmatpush1.msra.mxu0 %v302
        %521 = vmatprep.subr.mxu0 %v305
        %522 = vmatpush1.msra.mxu0 %v304
        %523 = vmatprep.subr.mxu0 %v307
        %524 = vmatpush1.msra.mxu0 %v306
        %525 = vmatprep.mubr.f32.mxu0 %v205
        %526 = vmatmul.mubr.f32.gmra.mrb[0].mxu0 %v204
        %v527 = vpop.f32.mrb[0].mxu0
        %v528 = vadd.f32 %v399, %v527
        %v529 = vpop.f32.mrb[0].mxu0
        %v530 = vadd.f32 %v399, %v529
        %531 = vmatprep.mubr.f32.mxu0 %v210
        %532 = vmatmul.mubr.f32.gmra.mrb[0].mxu0 %v209
        %v533 = vpop.f32.mrb[0].mxu0
        %v534 = vadd.f32 %v404, %v533
        %v535 = vpop.f32.mrb[0].mxu0
        %v536 = vadd.f32 %v404, %v535
        %537 = vmatprep.mubr.f32.mxu0 %v215
        %538 = vmatmul.mubr.f32.gmra.mrb[0].mxu0 %v214
        %v539 = vpop.f32.mrb[0].mxu0
        %v540 = vadd.f32 %v409, %v539
        %v541 = vpop.f32.mrb[0].mxu0
        %v542 = vadd.f32 %v409, %v541
        %543 = vmatprep.mubr.f32.mxu0 %v220
        %544 = vmatmul.mubr.f32.gmra.mrb[0].mxu0 %v219
        %v545 = vpop.f32.mrb[0].mxu0
        %v546 = vadd.f32 %v414, %v545
        %v547 = vpop.f32.mrb[0].mxu0
        %v548 = vadd.f32 %v414, %v547
        %549 = vmatprep.mubr.f32.mxu0 %v225
        %550 = vmatmul.mubr.f32.gmra.mrb[0].mxu0 %v224
        %v551 = vpop.f32.mrb[0].mxu0
        %v552 = vadd.f32 %v419, %v551
        %v553 = vpop.f32.mrb[0].mxu0
        %v554 = vadd.f32 %v419, %v553
        %555 = vmatprep.mubr.f32.mxu0 %v230
        %556 = vmatmul.mubr.f32.gmra.mrb[0].mxu0 %v229
        %v557 = vpop.f32.mrb[0].mxu0
        %v558 = vadd.f32 %v424, %v557
        %v559 = vpop.f32.mrb[0].mxu0
        %v560 = vadd.f32 %v424, %v559
        %561 = vmatprep.mubr.f32.mxu0 %v235
        %562 = vmatmul.mubr.f32.gmra.mrb[0].mxu0 %v234
        %v563 = vpop.f32.mrb[0].mxu0
        %v564 = vadd.f32 %v429, %v563
        %v565 = vpop.f32.mrb[0].mxu0
        %v566 = vadd.f32 %v429, %v565
        %567 = vmatprep.mubr.f32.mxu0 %v240
        %568 = vmatmul.mubr.f32.gmra.mrb[0].mxu0 %v239
        %v569 = vpop.f32.mrb[0].mxu0
        %v570 = vadd.f32 %v434, %v569
        %v571 = vpop.f32.mrb[0].mxu0
        %v572 = vadd.f32 %v434, %v571
        %573 = vdwg.mxu0
        %574 = vmatprep.subr.mxu0 %v309
        %575 = vmatpush1.msra.mxu0 %v308
        %576 = vmatprep.subr.mxu0 %v311
        %577 = vmatpush1.msra.mxu0 %v310
        %578 = vmatprep.subr.mxu0 %v313
        %579 = vmatpush1.msra.mxu0 %v312
        %580 = vmatprep.subr.mxu0 %v315
        %581 = vmatpush1.msra.mxu0 %v314
        %582 = vmatprep.subr.mxu0 %v317
        %583 = vmatpush1.msra.mxu0 %v316
        %584 = vmatprep.subr.mxu0 %v319
        %585 = vmatpush1.msra.mxu0 %v318
        %586 = vmatprep.subr.mxu0 %v321
        %587 = vmatpush1.msra.mxu0 %v320
        %588 = vmatprep.subr.mxu0 %v323
        %589 = vmatpush1.msra.mxu0 %v322
        %590 = vmatprep.subr.mxu0 %v325
        %591 = vmatpush1.msra.mxu0 %v324
        %592 = vmatprep.subr.mxu0 %v327
        %593 = vmatpush1.msra.mxu0 %v326
        %594 = vmatprep.subr.mxu0 %v329
        %595 = vmatpush1.msra.mxu0 %v328
        %596 = vmatprep.subr.mxu0 %v331
        %597 = vmatpush1.msra.mxu0 %v330
        %598 = vmatprep.subr.mxu0 %v333
        %599 = vmatpush1.msra.mxu0 %v332
        %600 = vmatprep.subr.mxu0 %v335
        %601 = vmatpush1.msra.mxu0 %v334
        %602 = vmatprep.subr.mxu0 %v337
        %603 = vmatpush1.msra.mxu0 %v336
        %604 = vmatprep.subr.mxu0 %v339
        %605 = vmatpush1.msra.mxu0 %v338
        %606 = vmatprep.subr.mxu0 %v341
        %607 = vmatpush1.msra.mxu0 %v340
        %608 = vmatprep.subr.mxu0 %v343
        %609 = vmatpush1.msra.mxu0 %v342
        %610 = vmatprep.subr.mxu0 %v345
        %611 = vmatpush1.msra.mxu0 %v344
        %612 = vmatprep.subr.mxu0 %v347
        %613 = vmatpush1.msra.mxu0 %v346
        %614 = vmatprep.subr.mxu0 %v349
        %615 = vmatpush1.msra.mxu0 %v348
        %616 = vmatprep.subr.mxu0 %v351
        %617 = vmatpush1.msra.mxu0 %v350
        %618 = vmatprep.subr.mxu0 %v353
        %619 = vmatpush1.msra.mxu0 %v352
        %620 = vmatprep.subr.mxu0 %v355
        %621 = vmatpush1.msra.mxu0 %v354
        %622 = vmatprep.subr.mxu0 %v357
        %623 = vmatpush1.msra.mxu0 %v356
        %624 = vmatprep.subr.mxu0 %v359
        %625 = vmatpush1.msra.mxu0 %v358
        %626 = vmatprep.subr.mxu0 %v361
        %627 = vmatpush1.msra.mxu0 %v360
        %628 = vmatprep.subr.mxu0 %v363
        %629 = vmatpush1.msra.mxu0 %v362
        %630 = vmatprep.subr.mxu0 %v365
        %631 = vmatpush1.msra.mxu0 %v364
        %632 = vmatprep.subr.mxu0 %v367
        %633 = vmatpush1.msra.mxu0 %v366
        %634 = vmatprep.subr.mxu0 %v369
        %635 = vmatpush1.msra.mxu0 %v368
        %636 = vmatprep.subr.mxu0 %v371
        %637 = vmatpush1.msra.mxu0 %v370
        %638 = vmatprep.mubr.f32.mxu0 %v207
        %639 = vmatmul.mubr.f32.gmra.mrb[0].mxu0 %v206
        %v640 = vpop.f32.mrb[0].mxu0
        %v641 = vadd.f32 %v528, %v640
        %v642 = vpop.f32.mrb[0].mxu0
        %v643 = vadd.f32 %v530, %v642
        %644 = vmatprep.mubr.f32.mxu0 %v212
        %645 = vmatmul.mubr.f32.gmra.mrb[0].mxu0 %v211
        %v646 = vpop.f32.mrb[0].mxu0
        %v647 = vadd.f32 %v534, %v646
        %v648 = vpop.f32.mrb[0].mxu0
        %v649 = vadd.f32 %v536, %v648
        %650 = vmatprep.mubr.f32.mxu0 %v217
        %651 = vmatmul.mubr.f32.gmra.mrb[0].mxu0 %v216
        %v652 = vpop.f32.mrb[0].mxu0
        %v653 = vadd.f32 %v540, %v652
        %v654 = vpop.f32.mrb[0].mxu0
        %v655 = vadd.f32 %v542, %v654
        %656 = vmatprep.mubr.f32.mxu0 %v222
        %657 = vmatmul.mubr.f32.gmra.mrb[0].mxu0 %v221
        %v658 = vpop.f32.mrb[0].mxu0
        %v659 = vadd.f32 %v546, %v658
        %v660 = vpop.f32.mrb[0].mxu0
        %v661 = vadd.f32 %v548, %v660
        %662 = vmatprep.mubr.f32.mxu0 %v227
        %663 = vmatmul.mubr.f32.gmra.mrb[0].mxu0 %v226
        %v664 = vpop.f32.mrb[0].mxu0
        %v665 = vadd.f32 %v552, %v664
        %v666 = vpop.f32.mrb[0].mxu0
        %v667 = vadd.f32 %v554, %v666
        %668 = vmatprep.mubr.f32.mxu0 %v232
        %669 = vmatmul.mubr.f32.gmra.mrb[0].mxu0 %v231
        %v670 = vpop.f32.mrb[0].mxu0
        %v671 = vadd.f32 %v558, %v670
        %v672 = vpop.f32.mrb[0].mxu0
        %v673 = vadd.f32 %v560, %v672
        %674 = vmatprep.mubr.f32.mxu0 %v237
        %675 = vmatmul.mubr.f32.gmra.mrb[0].mxu0 %v236
        %v676 = vpop.f32.mrb[0].mxu0
        %v677 = vadd.f32 %v564, %v676
        %v678 = vpop.f32.mrb[0].mxu0
        %v679 = vadd.f32 %v566, %v678
        %680 = vmatprep.mubr.f32.mxu0 %v242
        %681 = vmatmul.mubr.f32.gmra.mrb[0].mxu0 %v241
        %v682 = vpop.f32.mrb[0].mxu0
        %v683 = vadd.f32 %v570, %v682
        %v684 = vpop.f32.mrb[0].mxu0
        %v685 = vadd.f32 %v572, %v684
        %686 = vdwg.mxu0
        %687 = vmatprep.subr.mxu0 %v373
        %688 = vmatpush1.msra.mxu0 %v372
        %689 = vmatprep.subr.mxu0 %v375
        %690 = vmatpush1.msra.mxu0 %v374
        %691 = vmatprep.subr.mxu0 %v377
        %692 = vmatpush1.msra.mxu0 %v376
        %693 = vmatprep.subr.mxu0 %v379
        %694 = vmatpush1.msra.mxu0 %v378
        %695 = vmatprep.subr.mxu0 %v381
        %696 = vmatpush1.msra.mxu0 %v380
        %697 = vmatprep.subr.mxu0 %v383
        %698 = vmatpush1.msra.mxu0 %v382
        %699 = vmatprep.subr.mxu0 %v385
        %700 = vmatpush1.msra.mxu0 %v384
        %701 = vmatprep.subr.mxu0 %v387
        %702 = vmatpush1.msra.mxu0 %v386
        %703 = vmatprep.subr.mxu0 0.0
        %704 = vmatpush1.msra.mxu0 0.0
        %705 = vmatprep.subr.mxu0 0.0
        %706 = vmatpush1.msra.mxu0 0.0
        %707 = vmatprep.subr.mxu0 0.0
        %708 = vmatpush1.msra.mxu0 0.0
        %709 = vmatprep.subr.mxu0 0.0
        %710 = vmatpush1.msra.mxu0 0.0
        %711 = vmatprep.subr.mxu0 0.0
        %712 = vmatpush1.msra.mxu0 0.0
        %713 = vmatprep.subr.mxu0 0.0
        %714 = vmatpush1.msra.mxu0 0.0
        %715 = vmatprep.subr.mxu0 0.0
        %716 = vmatpush1.msra.mxu0 0.0
        %717 = vmatprep.subr.mxu0 0.0
        %718 = vmatpush1.msra.mxu0 0.0
        %719 = vmatprep.subr.mxu0 0.0
        %720 = vmatpush1.msra.mxu0 0.0
        %721 = vmatprep.subr.mxu0 0.0
        %722 = vmatpush1.msra.mxu0 0.0
        %723 = vmatprep.subr.mxu0 0.0
        %724 = vmatpush1.msra.mxu0 0.0
        %725 = vmatprep.subr.mxu0 0.0
        %726 = vmatpush1.msra.mxu0 0.0
        %727 = vmatprep.subr.mxu0 0.0
        %728 = vmatpush1.msra.mxu0 0.0
        %729 = vmatprep.subr.mxu0 0.0
        %730 = vmatpush1.msra.mxu0 0.0
        %731 = vmatprep.subr.mxu0 0.0
        %732 = vmatpush1.msra.mxu0 0.0
        %733 = vmatprep.subr.mxu0 0.0
        %734 = vmatpush1.msra.mxu0 0.0
        %735 = vmatprep.subr.mxu0 0.0
        %736 = vmatpush1.msra.mxu0 0.0
        %737 = vmatprep.subr.mxu0 0.0
        %738 = vmatpush1.msra.mxu0 0.0
        %739 = vmatprep.subr.mxu0 0.0
        %740 = vmatpush1.msra.mxu0 0.0
        %741 = vmatprep.subr.mxu0 0.0
        %742 = vmatpush1.msra.mxu0 0.0
        %743 = vmatprep.subr.mxu0 0.0
        %744 = vmatpush1.msra.mxu0 0.0
        %745 = vmatprep.subr.mxu0 0.0
        %746 = vmatpush1.msra.mxu0 0.0
        %747 = vmatprep.subr.mxu0 0.0
        %748 = vmatpush1.msra.mxu0 0.0
        %749 = vmatprep.subr.mxu0 0.0
        %750 = vmatpush1.msra.mxu0 0.0
        %751 = vmatprep.mubr.f32.mxu0 0.0
        %752 = vmatmul.mubr.f32.gmra.mrb[0].mxu0 %v438
        %v753 = vpop.f32.mrb[0].mxu0
        %v754 = vadd.f32 %v641, %v753
        %v755 = vpop.f32.mrb[0].mxu0
        %v756 = vadd.f32 %v643, %v755
        %757 = vmatprep.mubr.f32.mxu0 0.0
        %758 = vmatmul.mubr.f32.gmra.mrb[0].mxu0 %v441
        %v759 = vpop.f32.mrb[0].mxu0
        %v760 = vadd.f32 %v647, %v759
        %v761 = vpop.f32.mrb[0].mxu0
        %v762 = vadd.f32 %v649, %v761
        %763 = vmatprep.mubr.f32.mxu0 0.0
        %764 = vmatmul.mubr.f32.gmra.mrb[0].mxu0 %v444
        %v765 = vpop.f32.mrb[0].mxu0
        %v766 = vadd.f32 %v653, %v765
        %v767 = vpop.f32.mrb[0].mxu0
        %v768 = vadd.f32 %v655, %v767
        %769 = vmatprep.mubr.f32.mxu0 0.0
        %770 = vmatmul.mubr.f32.gmra.mrb[0].mxu0 %v447
        %v771 = vpop.f32.mrb[0].mxu0
        %v772 = vadd.f32 %v659, %v771
        %v773 = vpop.f32.mrb[0].mxu0
        %v774 = vadd.f32 %v661, %v773
        %775 = vmatprep.mubr.f32.mxu0 0.0
        %776 = vmatmul.mubr.f32.gmra.mrb[0].mxu0 %v450
        %v777 = vpop.f32.mrb[0].mxu0
        %v778 = vadd.f32 %v665, %v777
        %v779 = vpop.f32.mrb[0].mxu0
        %v780 = vadd.f32 %v667, %v779
        %781 = vmatprep.mubr.f32.mxu0 0.0
        %782 = vmatmul.mubr.f32.gmra.mrb[0].mxu0 %v453
        %v783 = vpop.f32.mrb[0].mxu0
        %v784 = vadd.f32 %v671, %v783
        %v785 = vpop.f32.mrb[0].mxu0
        %v786 = vadd.f32 %v673, %v785
        %787 = vmatprep.mubr.f32.mxu0 0.0
        %788 = vmatmul.mubr.f32.gmra.mrb[0].mxu0 %v456
        %v789 = vpop.f32.mrb[0].mxu0
        %v790 = vadd.f32 %v677, %v789
        %v791 = vpop.f32.mrb[0].mxu0
        %v792 = vadd.f32 %v679, %v791
        %793 = vmatprep.mubr.f32.mxu0 0.0
        %794 = vmatmul.mubr.f32.gmra.mrb[0].mxu0 %v459
        %v795 = vpop.f32.mrb[0].mxu0
        %v796 = vadd.f32 %v683, %v795
        %v797 = vpop.f32.mrb[0].mxu0
        %v798 = vadd.f32 %v685, %v797
        %799 = vdwg.mxu0
        %v800 = vmax.f32 %v754, 0.0
        %v801 = vmax.f32 %v756, 0.0
        %v802 = vmax.f32 %v760, 0.0
        %v803 = vmax.f32 %v762, 0.0
        %v804 = vmax.f32 %v766, 0.0
        %v805 = vmax.f32 %v768, 0.0
        %v806 = vmax.f32 %v772, 0.0
        %v807 = vmax.f32 %v774, 0.0
        %v808 = vmax.f32 %v778, 0.0
        %v809 = vmax.f32 %v780, 0.0
        %v810 = vmax.f32 %v784, 0.0
        %v811 = vmax.f32 %v786, 0.0
        %v812 = vmax.f32 %v790, 0.0
        %v813 = vmax.f32 %v792, 0.0
        %v814 = vmax.f32 %v796, 0.0
        %v815 = vmax.f32 %v798, 0.0
        %816 = vst [vmem:[%s203] sm:$0xff] %v800
        %817 = vst [vmem:[%s203 + $0x8] sm:$0xff] %v801
        %818 = vst [vmem:[%s203 + $0x10] sm:$0xff] %v802
        %819 = vst [vmem:[%s203 + $0x18] sm:$0xff] %v803
        %820 = vst [vmem:[%s203 + $0x20] sm:$0xff] %v804
        %821 = vst [vmem:[%s203 + $0x28] sm:$0xff] %v805
        %822 = vst [vmem:[%s203 + $0x30] sm:$0xff] %v806
        %823 = vst [vmem:[%s203 + $0x38] sm:$0xff] %v807
        %824 = vst [vmem:[%s203 + $0x40] sm:$0xff] %v808
        %825 = vst [vmem:[%s203 + $0x48] sm:$0xff] %v809
        %826 = vst [vmem:[%s203 + $0x50] sm:$0xff] %v810
        %827 = vst [vmem:[%s203 + $0x58] sm:$0xff] %v811
        %828 = vst [vmem:[%s203 + $0x60] sm:$0xff] %v812
        %829 = vst [vmem:[%s203 + $0x68] sm:$0xff] %v813
        %830 = vst [vmem:[%s203 + $0x70] sm:$0xff] %v814
        %831 = vst [vmem:[%s203 + $0x78] sm:$0xff] %v815
        %s832 = sand.u32 %s97, 1
        %s833 = scalar_lea.sflag [#allocation4], %s832
        %s834 = sand.u32 %s97, 1
        %s835 = smul.addr %s834, 128
        %s836 = scalar_lea.vmem [#allocation7], %s835
        // Predicated region
        $region41: #{tpu_custom_call.1} parent=31 // pred_check
          %p837 = pneg %p107
        $region42: #{tpu_custom_call.1} parent=31 // pred_check_branch
          %839 = sbr.rel (%p837) target = $region44
        $region43: #{tpu_custom_call.1} parent=31 // pred_region
          %s841 = ssub.s32 2048, 2048
          %842 = vsyncadd %s833, %s841
          %s843 = smul.addr %s21, 16
          %s844 = smul.addr %s843, 128
          %s845 = scalar_lea.hbm %s3, %s844
          %s846 = sshll.u32 %s836, 4
          %s847 = int_to_ptr.vmem [resolvable:$true] %s846
          %852 = dma.vmem_to_hbm [thread:$0]  %s847, 2048, %s845, %s833, 256, 256, 16
        $region44: #{tpu_custom_call.1} parent=31 // pred_fallthru
          _
      $region32: #{tpu_custom_call.1} parent=5 // pred_fallthru
        _
      %p853 = scmp.le.s32.totalorder 2, %s16
      // Predicated region
      $region45: #{tpu_custom_call.1} parent=5 // pred_check
        %p854 = pneg %p853
      $region46: #{tpu_custom_call.1} parent=5 // pred_check_branch
        %856 = sbr.rel (%p854) target = $region48
      $region47: #{tpu_custom_call.1} parent=5 // pred_region
        %s857 = ssub.s32 %s16, 2
        // Predicated region
        $region49: #{tpu_custom_call.1} parent=47 // pred_check
          %p858 = pneg %p113
        $region50: #{tpu_custom_call.1} parent=47 // pred_check_branch
          %860 = sbr.rel (%p858) target = $region52
        $region51: #{tpu_custom_call.1} parent=47 // pred_region
          %s861 = sand.u32 %s98, 1
          %s862 = scalar_lea.sflag [#allocation4], %s861
          %s863 = sand.u32 %s98, 1
          %s864 = smul.addr %s863, 128
          %s865 = scalar_lea.vmem [#allocation7], %s864
          %866 = dma.done %s862, 2048
        $region52: #{tpu_custom_call.1} parent=47 // pred_fallthru
          _
      $region48: #{tpu_custom_call.1} parent=5 // pred_fallthru
        _
    $region6: #{tpu_custom_call.1} parent=1 // loop_footer
      %s20 = sadd.s32 1, %s16
    $region7: #{tpu_custom_call.1} parent=1 // loop_footer_branch
      %15 = sbr.rel target = $region3
    $region8: #{tpu_custom_call.1} parent=1 // loop_exit
      _
    %867 = vsyncpa [#allocation3], 1
    %s868 = scalar_lea.sflag [#allocation3], 1
    %869 = vsyncpa %s868, 1
    %870 = vsyncpa [#allocation6], 1
    %s871 = scalar_lea.sflag [#allocation6], 1
    %872 = vsyncpa %s871, 1
    %873 = vsyncpa [#allocation4], 1
    %s874 = scalar_lea.sflag [#allocation4], 1
    %875 = vsyncpa %s874, 1

</llo_original>
